<compile_context>
chip_gen: v7x
topology: tpu7x:2x2x1
jax: 0.10.0
libtpu: 0.0.40
codegen_flags: <defaults>
</compile_context>

<pallas_src>
import functools

import jax
import jax.numpy as jnp
from jax.experimental import pallas as pl
from jax.experimental.pallas import tpu as pltpu


def _swish(z):
    # z * sigmoid(z); sigmoid lowers to the EUP (logistic), mul on the VPU.
    return z * jax.nn.sigmoid(z)


def _fc_kernel(x_ref, w_ref, b_ref, o_ref, acc_ref, *, activation):
    k = pl.program_id(3)

    @pl.when(k == 0)
    def _():
        acc_ref[...] = jnp.zeros_like(acc_ref)

    acc_ref[...] += jnp.dot(
        x_ref[...], w_ref[...], preferred_element_type=jnp.float32
    )

    @pl.when(k == pl.num_programs(3) - 1)
    def _():
        z = acc_ref[...] + b_ref[...].astype(jnp.float32)  # (tm,tn) + (1,tn)
        o_ref[...] = activation(z).astype(o_ref.dtype)


def _choose_tile(dim, pref):
    """Return (tile, padded_dim). Full-dim block if small, else a fixed tile."""
    if dim <= pref:
        return dim, dim          # block == full dim: always legal, no padding
    padded = pl.cdiv(dim, pref) * pref
    return pref, padded


def _pad_axis(a, axis, target):
    cur = a.shape[axis]
    if cur == target:
        return a
    pad = [(0, 0)] * a.ndim
    pad[axis] = (0, target - cur)
    return jnp.pad(a, pad)


def fc_layer(x, weight, bias, activation=_swish,
             *, tm_pref=256, tn_pref=256, tk_pref=512):
    """activation(bmm(x, weight) + bias[:, None, :]) via a fused Pallas kernel."""
    E, M, K = x.shape
    Ew, Kw, N = weight.shape
    assert E == Ew and K == Kw and bias.shape == (E, N)

    tm, Mp = _choose_tile(M, tm_pref)   # tm multiple of 8 (or == M)
    tn, Np = _choose_tile(N, tn_pref)   # tn multiple of 128 (or == N)
    tk, Kp = _choose_tile(K, tk_pref)   # tk multiple of 128 (or == K)

    # Zero-padding is only applied when a dim exceeds its tile preference and
    # is ragged; zeros are exact for the K reduction, and padded M/N rows/cols
    # are sliced off below.  For small inputs (the common ensemble-MLP case)
    # nothing is padded and nothing is sliced.
    xp = _pad_axis(_pad_axis(x, 1, Mp), 2, Kp)
    wp = _pad_axis(_pad_axis(weight, 1, Kp), 2, Np)
    bp = _pad_axis(bias[:, None, :], 2, Np)        # (E, 1, Np)

    grid = (E, Mp // tm, Np // tn, Kp // tk)

    out = pl.pallas_call(
        functools.partial(_fc_kernel, activation=activation),
        out_shape=jax.ShapeDtypeStruct((E, Mp, Np), x.dtype),
        grid_spec=pltpu.PrefetchScalarGridSpec(
            num_scalar_prefetch=0,
            grid=grid,
            in_specs=[
                pl.BlockSpec((None, tm, tk), lambda e, i, j, k: (e, i, k)),
                pl.BlockSpec((None, tk, tn), lambda e, i, j, k: (e, k, j)),
                pl.BlockSpec((None, 1, tn), lambda e, i, j, k: (e, 0, j)),
            ],
            out_specs=pl.BlockSpec((None, tm, tn), lambda e, i, j, k: (e, i, j)),
            scratch_shapes=[pltpu.VMEM((tm, tn), jnp.float32)],
        ),
        compiler_params=pltpu.CompilerParams(
            dimension_semantics=("parallel", "parallel", "parallel", "arbitrary"),
        ),
    )(xp, wp, bp)

    if (Mp, Np) != (M, N):
        out = out[:, :M, :N]
    return out


if __name__ == "__main__":
    key = jax.random.PRNGKey(0)
    kx, kw, kb = jax.random.split(key, 3)

    # Small shapes consistent with FCLayer: ensemble=4, batch=8, in=32, out=32.
    E, B, D_IN, D_OUT = 4, 8, 32, 32
    x = jax.random.normal(kx, (E, B, D_IN), dtype=jnp.float32)
    w = jax.random.normal(kw, (E, D_IN, D_OUT), dtype=jnp.float32) / jnp.sqrt(D_IN)
    b = jax.random.normal(kb, (E, D_OUT), dtype=jnp.float32)

    y = fc_layer(x, w, b)           # default activation: Swish
    jax.block_until_ready(y)

    # Pure-JAX reference.
    z = jnp.einsum(
        "emk,ekn->emn", x, w,
        preferred_element_type=jnp.float32,
        precision=jax.lax.Precision.HIGHEST,
    ) + b[:, None, :]
    y_ref = z * jax.nn.sigmoid(z)

    assert y.shape == (E, B, D_OUT) and y.dtype == x.dtype
    assert jnp.allclose(y, y_ref, atol=1e-2, rtol=1e-2), float(
        jnp.max(jnp.abs(y - y_ref))
    )

    print("KERNEL_OK")
</pallas_src>

<mosaic_0001>
module attributes {stable_mosaic.version = 11 : i64} {
  func.func @_fc_kernel(%arg0: i32, %arg1: i32, %arg2: i32, %arg3: i32, %arg4: memref<1x8x32xf32, #tpu.memory_space<vmem>>, %arg5: memref<1x32x32xf32, #tpu.memory_space<vmem>>, %arg6: memref<1x1x32xf32, #tpu.memory_space<vmem>>, %arg7: memref<1x8x32xf32, #tpu.memory_space<vmem>>, %arg8: memref<8x32xf32, #tpu.memory_space<vmem>>) attributes {dimension_semantics = [#tpu.dimension_semantics<parallel>, #tpu.dimension_semantics<parallel>, #tpu.dimension_semantics<parallel>, #tpu.dimension_semantics<arbitrary>], iteration_bounds = array<i64: 4, 1, 1, 1>, scalar_prefetch = 0 : i64, scratch_operands = 1 : i64, tpu.core_type = #tpu.core_type<tc>, window_params = [{transform_indices = @transform_0, window_bounds = array<i64: 1, 8, 32>}, {transform_indices = @transform_1, window_bounds = array<i64: 1, 32, 32>}, {transform_indices = @transform_2, window_bounds = array<i64: 1, 1, 32>}, {transform_indices = @transform_3, window_bounds = array<i64: 1, 8, 32>}]} {
    %c0_i32 = arith.constant 0 : i32
    %0 = arith.cmpi eq, %arg3, %c0_i32 : i32
    %1 = arith.extui %0 : i1 to i32
    %c0_i32_0 = arith.constant 0 : i32
    %2 = arith.cmpi ne, %1, %c0_i32_0 : i32
    scf.if %2 {
      %cst_12 = arith.constant 0.000000e+00 : f32
      %14 = vector.broadcast %cst_12 : f32 to vector<8x32xf32>
      %c0_13 = arith.constant 0 : index
      %c0_14 = arith.constant 0 : index
      %15 = vector.load %arg8[%c0_13, %c0_14] : memref<8x32xf32, #tpu.memory_space<vmem>>, vector<8x32xf32>
      tpu.vector_store %arg8[%c0_13, %c0_14], %14 {strides = array<i32>} : memref<8x32xf32, #tpu.memory_space<vmem>>, vector<8x32xf32>,
    } else {
    }
    %c0 = arith.constant 0 : index
    %c0_1 = arith.constant 0 : index
    %3 = vector.load %arg8[%c0, %c0_1] : memref<8x32xf32, #tpu.memory_space<vmem>>, vector<8x32xf32>
    %c0_2 = arith.constant 0 : index
    %c0_3 = arith.constant 0 : index
    %c0_4 = arith.constant 0 : index
    %4 = vector.load %arg4[%c0_2, %c0_3, %c0_4] : memref<1x8x32xf32, #tpu.memory_space<vmem>>, vector<1x8x32xf32>
    %5 = vector.shape_cast %4 : vector<1x8x32xf32> to vector<8x32xf32>
    %c0_5 = arith.constant 0 : index
    %c0_6 = arith.constant 0 : index
    %c0_7 = arith.constant 0 : index
    %6 = vector.load %arg5[%c0_5, %c0_6, %c0_7] : memref<1x32x32xf32, #tpu.memory_space<vmem>>, vector<1x32x32xf32>
    %7 = vector.shape_cast %6 : vector<1x32x32xf32> to vector<32x32xf32>
    %cst = arith.constant dense<0.000000e+00> : vector<8x32xf32>
    %8 = tpu.matmul %5, %7, %cst {dimension_numbers = #tpu.dot_dimension_numbers<[1], [0], [0], [1], [0, 0, 1, 1], [], []>} : vector<8x32xf32>, vector<32x32xf32>, vector<8x32xf32> -> vector<8x32xf32>
    %9 = arith.addf %3, %8 : vector<8x32xf32>
    %c0_8 = arith.constant 0 : index
    %c0_9 = arith.constant 0 : index
    %10 = vector.load %arg8[%c0_8, %c0_9] : memref<8x32xf32, #tpu.memory_space<vmem>>, vector<8x32xf32>
    tpu.vector_store %arg8[%c0_8, %c0_9], %9 {strides = array<i32>} : memref<8x32xf32, #tpu.memory_space<vmem>>, vector<8x32xf32>,
    %c0_i32_10 = arith.constant 0 : i32
    %11 = arith.cmpi eq, %arg3, %c0_i32_10 : i32
    %12 = arith.extui %11 : i1 to i32
    %c0_i32_11 = arith.constant 0 : i32
    %13 = arith.cmpi ne, %12, %c0_i32_11 : i32
    scf.if %13 {
      %c0_12 = arith.constant 0 : index
      %c0_13 = arith.constant 0 : index
      %14 = vector.load %arg8[%c0_12, %c0_13] : memref<8x32xf32, #tpu.memory_space<vmem>>, vector<8x32xf32>
      %c0_14 = arith.constant 0 : index
      %c0_15 = arith.constant 0 : index
      %c0_16 = arith.constant 0 : index
      %15 = vector.load %arg6[%c0_14, %c0_15, %c0_16] : memref<1x1x32xf32, #tpu.memory_space<vmem>>, vector<1x1x32xf32>
      %16 = vector.shape_cast %15 : vector<1x1x32xf32> to vector<1x32xf32>
      %17 = vector.broadcast %16 : vector<1x32xf32> to vector<8x32xf32>
      %18 = arith.addf %14, %17 : vector<8x32xf32>
      %19 = arith.negf %18 : vector<8x32xf32>
      %20 = math.exp %19 : vector<8x32xf32>
      %cst_17 = arith.constant 1.000000e+00 : f32
      %21 = vector.broadcast %cst_17 : f32 to vector<8x32xf32>
      %22 = arith.addf %21, %20 : vector<8x32xf32>
      %23 = arith.divf %21, %22 : vector<8x32xf32>
      %24 = arith.mulf %18, %23 : vector<8x32xf32>
      %c0_18 = arith.constant 0 : index
      %c0_19 = arith.constant 0 : index
      %c0_20 = arith.constant 0 : index
      %25 = vector.load %arg7[%c0_18, %c0_19, %c0_20] : memref<1x8x32xf32, #tpu.memory_space<vmem>>, vector<1x8x32xf32>
      %26 = vector.shape_cast %25 : vector<1x8x32xf32> to vector<8x32xf32>
      %27 = vector.shape_cast %24 : vector<8x32xf32> to vector<1x8x32xf32>
      tpu.vector_store %arg7[%c0_18, %c0_19, %c0_20], %27 {strides = array<i32>} : memref<1x8x32xf32, #tpu.memory_space<vmem>>, vector<1x8x32xf32>,
    } else {
    }
    return
  }
  func.func @transform_0(%arg0: i32, %arg1: i32, %arg2: i32, %arg3: i32) -> (i32, i32, i32) {
    %c0_i32 = arith.constant 0 : i32
    return %arg0, %arg1, %arg3 : i32, i32, i32
  }
  func.func @transform_1(%arg0: i32, %arg1: i32, %arg2: i32, %arg3: i32) -> (i32, i32, i32) {
    %c0_i32 = arith.constant 0 : i32
    return %arg0, %arg3, %arg2 : i32, i32, i32
  }
  func.func @transform_2(%arg0: i32, %arg1: i32, %arg2: i32, %arg3: i32) -> (i32, i32, i32) {
    %c0_i32 = arith.constant 0 : i32
    %c0_i32_0 = arith.constant 0 : i32
    return %arg0, %c0_i32, %arg2 : i32, i32, i32
  }
  func.func @transform_3(%arg0: i32, %arg1: i32, %arg2: i32, %arg3: i32) -> (i32, i32, i32) {
    %c0_i32 = arith.constant 0 : i32
    return %arg0, %arg1, %arg2 : i32, i32, i32
  }
}

</mosaic_0001>

<llo_original>
// kernel: tpu_custom_call.1
$region0: #{tpu_custom_call.1}
  #allocation0 [shape = 'u32[]', space=smem, size = 0x4, offset = 0x4, fixed_abs, tag = 'smem constant byte address 0x4 - core index']
  #allocation1 [shape = 'u32[144,128]{1,0:T(1,128)}', space=vmem, size = 0x12000, scoped, tag = 'internal scratch']
  #allocation2 [shape = 'f32[8,32]{1,0:T(8,128)}', space=vmem, size = 0x1000, scoped, tag = 'scratch operand']
  %s0 = inlined_call_operand.hbm [shape: f32[4,8,32], index: 0, kind: input, shape index: {}]
  %s1 = inlined_call_operand.hbm [shape: f32[4,32,32], index: 1, kind: input, shape index: {}]
  %s2 = inlined_call_operand.vmem [shape: f32[4,1,32], index: 2, kind: input, shape index: {}]
  %s3 = inlined_call_operand.hbm [shape: f32[4,8,32], index: 3, kind: output, shape index: {}]
  %s4 = sld [smem:[#allocation0]]
  $region61: #{tpu_custom_call.1} parent=0
    _
  %s6 = ssub.s32 1, %s4
  %s7 = scalar_select 0, %s6, %s4
  $region1: #{tpu_custom_call.1} parent=0
    #allocation3 [shape = 'u8[8192]{0}', space=vmem, size = 0x2000, scoped, tag = 'input window, operand 0']
    #allocation4 [shape = 's32[2]{0}', space=sflag, size = 0x8, scoped, tag = 'scoped memory for tpu_custom_call.1']
    #allocation5 [shape = 's32[2]{0}', space=sflag, size = 0x8, scoped, tag = 'scoped memory for tpu_custom_call.1']
    #allocation6 [shape = 'u8[32768]{0}', space=vmem, size = 0x8000, scoped, tag = 'input window, operand 1']
    #allocation7 [shape = 's32[2]{0}', space=sflag, size = 0x8, scoped, tag = 'scoped memory for tpu_custom_call.1']
    #allocation8 [shape = 'u8[8192]{0}', space=vmem, size = 0x2000, scoped, tag = 'output window, operand 0']
    %8 = vsyncpa [#allocation4], 0
    %s9 = scalar_lea.sflag [#allocation4], 1
    %10 = vsyncpa %s9, 0
    %11 = vsyncpa [#allocation7], 0
    %s12 = scalar_lea.sflag [#allocation7], 1
    %13 = vsyncpa %s12, 0
    %14 = vsyncpa [#allocation5], 0
    %s15 = scalar_lea.sflag [#allocation5], 1
    %16 = vsyncpa %s15, 0
    loop: start=0, step=1, limit=6
    $region2: #{tpu_custom_call.1} parent=1 // loop_pre_header
      _
    $region3: #{tpu_custom_call.1} parent=1 // loop_header
      %s18 = sphi 0, %s22
      %p19 = scmp.ge.s32.totalorder %s18, 6
      %s25 = sphi 0, %s51
      %s26 = sphi 0, %s47
      %s27 = sphi 0, %s43
      %s28 = sphi 0, %s39
      %s29 = sphi 0, %s25
      %s30 = sphi 0, %s26
      %s31 = sphi 0, %s27
      %s32 = sphi 0, %s28
      %s33 = sphi 0, %s29
      %s34 = sphi 0, %s30
      %s35 = sphi 0, %s31
      %s36 = sphi 0, %s32
      %s58 = sphi 0, %s60
      %s61 = sphi 0, %s58
      %s62 = sphi 0, %s61
      %s78 = sphi 0, %s62
      %s88 = sphi 0, %s90
      %s91 = sphi 0, %s88
      %s92 = sphi 0, %s91
      %s108 = sphi 0, %s92
      %s116 = sphi 0, %s118
      %s119 = sphi 0, %s116
      %s120 = sphi 0, %s119
      %s136 = sphi 0, %s120
      %s146 = sphi 0, %s148
      %s149 = sphi 0, %s146
      %s150 = sphi 0, %s149
      %s166 = sphi 0, %s150
    $region4: #{tpu_custom_call.1} parent=1 // loop_header_branch
      %21 = sbr.rel (%p19) target = $region8
    $region5: #{tpu_custom_call.1} parent=1 // loop_body
      %s23 = ssub.s32 %s18, 1
      %s24 = ssub.s32 %s18, 2
      %s37 = sadd.s32 1, %s28
      %p38 = scmp.ge.s32.totalorder %s37, 1
      %s39 = scalar_select %p38, 0, %s37
      %s40 = sadd.s32 1, %s27
      %s41 = scalar_select %p38, %s40, %s27
      %p42 = scmp.ge.s32.totalorder %s41, 1
      %s43 = scalar_select %p42, 0, %s41
      %s44 = sadd.s32 1, %s26
      %s45 = scalar_select %p42, %s44, %s26
      %p46 = scmp.ge.s32.totalorder %s45, 1
      %s47 = scalar_select %p46, 0, %s45
      %s48 = sadd.s32 1, %s25
      %s49 = scalar_select %p46, %s48, %s25
      %p50 = scmp.ge.s32.totalorder %s49, 4
      %s51 = scalar_select %p50, 0, %s49
      %s52 = ssub.s32 %s25, %s51
      %s53 = ssub.s32 %s26, %s47
      %s54 = sor.u32 %s52, %s53
      %s55 = ssub.s32 %s28, %s39
      %s56 = sor.u32 %s54, %s55
      %p57 = scmp.eq.s32.totalorder %s56, 0
      %s59 = sadd.s32 %s58, 1
      %s60 = scalar_select %p57, %s58, %s59
      %p63 = pneg %p57
      %p64 = scmp.eq.s32.totalorder %s18, 3
      %p65 = por %p63, %p64
      %p66 = scmp.ne.s32.totalorder %s58, %s61
      %p67 = scmp.eq.s32.totalorder %s18, 0
      %p68 = por %p66, %p67
      %p69 = scmp.ne.s32.totalorder %s58, %s61
      %p70 = scmp.eq.s32.totalorder %s23, 3
      %p71 = por %p69, %p70
      %p72 = scmp.ne.s32.totalorder %s61, %s62
      %p73 = scmp.eq.s32.totalorder %s23, 0
      %p74 = por %p72, %p73
      %p75 = scmp.ne.s32.totalorder %s61, %s62
      %p76 = scmp.eq.s32.totalorder %s24, 3
      %p77 = por %p75, %p76
      %p79 = scmp.ne.s32.totalorder %s62, %s78
      %p80 = scmp.eq.s32.totalorder %s24, 0
      %p81 = por %p79, %p80
      %s82 = ssub.s32 %s25, %s51
      %s83 = ssub.s32 %s28, %s39
      %s84 = sor.u32 %s82, %s83
      %s85 = ssub.s32 %s27, %s43
      %s86 = sor.u32 %s84, %s85
      %p87 = scmp.eq.s32.totalorder %s86, 0
      %s89 = sadd.s32 %s88, 1
      %s90 = scalar_select %p87, %s88, %s89
      %p93 = pneg %p87
      %p94 = scmp.eq.s32.totalorder %s18, 3
      %p95 = por %p93, %p94
      %p96 = scmp.ne.s32.totalorder %s88, %s91
      %p97 = scmp.eq.s32.totalorder %s18, 0
      %p98 = por %p96, %p97
      %p99 = scmp.ne.s32.totalorder %s88, %s91
      %p100 = scmp.eq.s32.totalorder %s23, 3
      %p101 = por %p99, %p100
      %p102 = scmp.ne.s32.totalorder %s91, %s92
      %p103 = scmp.eq.s32.totalorder %s23, 0
      %p104 = por %p102, %p103
      %p105 = scmp.ne.s32.totalorder %s91, %s92
      %p106 = scmp.eq.s32.totalorder %s24, 3
      %p107 = por %p105, %p106
      %p109 = scmp.ne.s32.totalorder %s92, %s108
      %p110 = scmp.eq.s32.totalorder %s24, 0
      %p111 = por %p109, %p110
      %s112 = ssub.s32 %s25, %s51
      %s113 = ssub.s32 %s27, %s43
      %s114 = sor.u32 %s112, %s113
      %p115 = scmp.eq.s32.totalorder %s114, 0
      %s117 = sadd.s32 %s116, 1
      %s118 = scalar_select %p115, %s116, %s117
      %p121 = pneg %p115
      %p122 = scmp.eq.s32.totalorder %s18, 3
      %p123 = por %p121, %p122
      %p124 = scmp.ne.s32.totalorder %s116, %s119
      %p125 = scmp.eq.s32.totalorder %s18, 0
      %p126 = por %p124, %p125
      %p127 = scmp.ne.s32.totalorder %s116, %s119
      %p128 = scmp.eq.s32.totalorder %s23, 3
      %p129 = por %p127, %p128
      %p130 = scmp.ne.s32.totalorder %s119, %s120
      %p131 = scmp.eq.s32.totalorder %s23, 0
      %p132 = por %p130, %p131
      %p133 = scmp.ne.s32.totalorder %s119, %s120
      %p134 = scmp.eq.s32.totalorder %s24, 3
      %p135 = por %p133, %p134
      %p137 = scmp.ne.s32.totalorder %s120, %s136
      %p138 = scmp.eq.s32.totalorder %s24, 0
      %p139 = por %p137, %p138
      %s140 = ssub.s32 %s25, %s51
      %s141 = ssub.s32 %s26, %s47
      %s142 = sor.u32 %s140, %s141
      %s143 = ssub.s32 %s27, %s43
      %s144 = sor.u32 %s142, %s143
      %p145 = scmp.eq.s32.totalorder %s144, 0
      %s147 = sadd.s32 %s146, 1
      %s148 = scalar_select %p145, %s146, %s147
      %p151 = pneg %p145
      %p152 = scmp.eq.s32.totalorder %s18, 3
      %p153 = por %p151, %p152
      %p154 = scmp.ne.s32.totalorder %s146, %s149
      %p155 = scmp.eq.s32.totalorder %s18, 0
      %p156 = por %p154, %p155
      %p157 = scmp.ne.s32.totalorder %s146, %s149
      %p158 = scmp.eq.s32.totalorder %s23, 3
      %p159 = por %p157, %p158
      %p160 = scmp.ne.s32.totalorder %s149, %s150
      %p161 = scmp.eq.s32.totalorder %s23, 0
      %p162 = por %p160, %p161
      %p163 = scmp.ne.s32.totalorder %s149, %s150
      %p164 = scmp.eq.s32.totalorder %s24, 3
      %p165 = por %p163, %p164
      %p167 = scmp.ne.s32.totalorder %s150, %s166
      %p168 = scmp.eq.s32.totalorder %s24, 0
      %p169 = por %p167, %p168
      %p170 = scmp.le.s32.totalorder 1, %s18
      %p171 = scmp.lt.s32.totalorder %s18, 5
      %p172 = pnand %p170, %p171
      %p173 = pneg %p172
      // Predicated region
      $region9: #{tpu_custom_call.1} parent=5 // pred_check
        _
      $region10: #{tpu_custom_call.1} parent=5 // pred_check_branch
        %175 = sbr.rel (%p172) target = $region12
      $region11: #{tpu_custom_call.1} parent=5 // pred_region
        %s176 = ssub.s32 %s18, 1
      $region12: #{tpu_custom_call.1} parent=5 // pred_fallthru
        _
      %p177 = scmp.lt.s32.totalorder %s18, 4
      // Predicated region
      $region13: #{tpu_custom_call.1} parent=5 // pred_check
        %p178 = pneg %p177
      $region14: #{tpu_custom_call.1} parent=5 // pred_check_branch
        %180 = sbr.rel (%p178) target = $region16
      $region15: #{tpu_custom_call.1} parent=5 // pred_region
        // Predicated region
        $region17: #{tpu_custom_call.1} parent=15 // pred_check
          %p181 = pneg %p68
        $region18: #{tpu_custom_call.1} parent=15 // pred_check_branch
          %183 = sbr.rel (%p181) target = $region20
        $region19: #{tpu_custom_call.1} parent=15 // pred_region
          %s184 = sand.u32 %s58, 1
          %s185 = scalar_lea.sflag [#allocation4], %s184
          %s186 = sand.u32 %s58, 1
          %s187 = smul.addr %s186, 8
          %s188 = scalar_lea.vmem [#allocation3], %s187
          %s190 = ssub.s32 128, 128
          %191 = vsyncadd %s185, %s190
          %s192 = sadd.s32 %s28, %s26
          %s193 = sadd.s32 %s192, %s25
          %s194 = smul.addr %s193, 128
          %s195 = scalar_lea.hbm %s0, %s194
          %s197 = sshll.u32 %s188, 4
          %s198 = int_to_ptr.vmem [resolvable:$true] %s197
          %200 = dma.hbm_to_vmem [thread:$0]  %s195, 128, %s198, %s185
        $region20: #{tpu_custom_call.1} parent=15 // pred_fallthru
          _
        // Predicated region
        $region21: #{tpu_custom_call.1} parent=15 // pred_check
          %p201 = pneg %p98
        $region22: #{tpu_custom_call.1} parent=15 // pred_check_branch
          %203 = sbr.rel (%p201) target = $region24
        $region23: #{tpu_custom_call.1} parent=15 // pred_region
          %s204 = sand.u32 %s88, 1
          %s205 = scalar_lea.sflag [#allocation7], %s204
          %s206 = sand.u32 %s88, 1
          %s207 = smul.addr %s206, 32
          %s208 = scalar_lea.vmem [#allocation6], %s207
          %s209 = smul.u32 4, %s28
          %s211 = ssub.s32 512, 512
          %212 = vsyncadd %s205, %s211
          %s213 = sadd.s32 %s27, %s209
          %s214 = smul.addr %s25, 4
          %s215 = sadd.s32 %s213, %s214
          %s216 = smul.addr %s215, 128
          %s217 = scalar_lea.hbm %s1, %s216
          %s218 = sshll.u32 %s208, 4
          %s219 = int_to_ptr.vmem [resolvable:$true] %s218
          %224 = dma.hbm_to_vmem [thread:$0]  %s217, 512, %s219, %s205, 128, 128, 8
        $region24: #{tpu_custom_call.1} parent=15 // pred_fallthru
          _
        // Predicated region
        $region25: #{tpu_custom_call.1} parent=15 // pred_check
          %p225 = pneg %p126
        $region26: #{tpu_custom_call.1} parent=15 // pred_check_branch
          %227 = sbr.rel (%p225) target = $region28
        $region27: #{tpu_custom_call.1} parent=15 // pred_region
          %p228 = scmp.lt.s32.totalorder %s25, 3
          %s229 = scalar_select %p228, %s25, 3
          %p230 = scmp.lt.s32.totalorder %s27, 0
          %s231 = scalar_select %p230, %s27, 0
          %s232 = sadd.s32 %s231, %s229
          %s233 = scalar_lea.vmem %s2, %s232
        $region28: #{tpu_custom_call.1} parent=15 // pred_fallthru
          _
      $region16: #{tpu_custom_call.1} parent=5 // pred_fallthru
        _
      %p234 = scmp.le.s32.totalorder 1, %s18
      %p235 = scmp.lt.s32.totalorder %s18, 5
      %p236 = pnand %p234, %p235
      %p237 = pneg %p236
      // Predicated region
      $region29: #{tpu_custom_call.1} parent=5 // pred_check
        _
      $region30: #{tpu_custom_call.1} parent=5 // pred_check_branch
        %239 = sbr.rel (%p236) target = $region32
      $region31: #{tpu_custom_call.1} parent=5 // pred_region
        %s240 = ssub.s32 %s18, 1
        %s241 = sand.u32 %s61, 1
        %s242 = scalar_lea.sflag [#allocation4], %s241
        %s243 = sand.u32 %s61, 1
        %s244 = smul.addr %s243, 8
        %s245 = scalar_lea.vmem [#allocation3], %s244
        // Predicated region
        $region33: #{tpu_custom_call.1} parent=31 // pred_check
          %p246 = pneg %p74
        $region34: #{tpu_custom_call.1} parent=31 // pred_check_branch
          %248 = sbr.rel (%p246) target = $region36
        $region35: #{tpu_custom_call.1} parent=31 // pred_region
          %249 = dma.done %s242, 128
        $region36: #{tpu_custom_call.1} parent=31 // pred_fallthru
          _
        %s250 = sand.u32 %s91, 1
        %s251 = scalar_lea.sflag [#allocation7], %s250
        %s252 = sand.u32 %s91, 1
        %s253 = smul.addr %s252, 32
        %s254 = scalar_lea.vmem [#allocation6], %s253
        // Predicated region
        $region37: #{tpu_custom_call.1} parent=31 // pred_check
          %p255 = pneg %p104
        $region38: #{tpu_custom_call.1} parent=31 // pred_check_branch
          %257 = sbr.rel (%p255) target = $region40
        $region39: #{tpu_custom_call.1} parent=31 // pred_region
          %258 = dma.done %s251, 512
        $region40: #{tpu_custom_call.1} parent=31 // pred_fallthru
          _
        %s259 = sand.u32 %s61, 1
        %s260 = scalar_lea.sflag [#allocation4], %s259
        %s261 = sand.u32 %s61, 1
        %s262 = smul.addr %s261, 8
        %s263 = scalar_lea.vmem [#allocation3], %s262
        %p264 = pneg %p74
        %p265 = pneg %p71
        %s266 = sand.u32 %s91, 1
        %s267 = scalar_lea.sflag [#allocation7], %s266
        %s268 = sand.u32 %s91, 1
        %s269 = smul.addr %s268, 32
        %s270 = scalar_lea.vmem [#allocation6], %s269
        %p271 = pneg %p104
        %p272 = pneg %p101
        %p273 = scmp.lt.s32.totalorder %s29, 3
        %s274 = scalar_select %p273, %s29, 3
        %p275 = scmp.lt.s32.totalorder %s31, 0
        %s276 = scalar_select %p275, %s31, 0
        %s277 = sadd.s32 %s276, %s274
        %s278 = scalar_lea.vmem %s2, %s277
        %p279 = pneg %p132
        %p280 = pneg %p129
        %p281 = pneg %p162
        %p282 = pneg %p159
        %s283 = sand.u32 %s149, 1
        %s284 = scalar_lea.sflag [#allocation5], %s283
        %s285 = sand.u32 %s149, 1
        %s286 = smul.addr %s285, 8
        %s287 = scalar_lea.vmem [#allocation8], %s286
        %s288 = smul.u32 4, %s32
        %p289 = scmp.lt.s32.totalorder %s29, 3
        %s290 = scalar_select %p289, %s29, 3
        %p291 = scmp.lt.s32.totalorder %s31, 0
        %s292 = scalar_select %p291, %s31, 0
        %s293 = sadd.s32 %s292, %s290
        %s294 = scalar_lea.vmem %s2, %s293
        %p295 = scmp.eq.s32.totalorder %s32, 0
        // Predicated region
        $region41: #{tpu_custom_call.1} parent=31 // pred_check
          %p296 = pneg %p295
        $region42: #{tpu_custom_call.1} parent=31 // pred_check_branch
          %298 = sbr.rel (%p296) target = $region44
        $region43: #{tpu_custom_call.1} parent=31 // pred_region
          %vm299 = vcmask 261120
          %300 = vst.msk [vmem:[#allocation2] sm:$0xff] %vm299, 0.0
        $region44: #{tpu_custom_call.1} parent=31 // pred_fallthru
          _
        %v301 = vld [vmem:[#allocation2] sm:$0xff]
        %v302 = vld [vmem:[%s245] sm:$0xff]
        %v303 = vld [vmem:[%s254] sm:$0xff]
        %v304 = vld [vmem:[%s254 + $0x8] sm:$0xff]
        %v305 = vld [vmem:[%s254 + $0x10] sm:$0xff]
        %v306 = vld [vmem:[%s254 + $0x18] sm:$0xff]
        %vm307 = vcmask 261120
        %v309 = vsel %vm307, %v302, 0
        %311 = vmatprep.subr.mxu0 0.0
        %312 = vmatpush1.msra.mxu0 %v303
        %313 = vmatprep.subr.mxu0 0.0
        %314 = vmatpush1.msra.mxu0 %v304
        %315 = vmatprep.subr.mxu0 0.0
        %316 = vmatpush1.msra.mxu0 %v305
        %317 = vmatprep.subr.mxu0 0.0
        %318 = vmatpush1.msra.mxu0 %v306
        %319 = vmatprep.subr.mxu0 0.0
        %320 = vmatpush1.msra.mxu0 0.0
        %321 = vmatprep.subr.mxu0 0.0
        %322 = vmatpush1.msra.mxu0 0.0
        %323 = vmatprep.subr.mxu0 0.0
        %324 = vmatpush1.msra.mxu0 0.0
        %325 = vmatprep.subr.mxu0 0.0
        %326 = vmatpush1.msra.mxu0 0.0
        %327 = vmatprep.subr.mxu0 0.0
        %328 = vmatpush1.msra.mxu0 0.0
        %329 = vmatprep.subr.mxu0 0.0
        %330 = vmatpush1.msra.mxu0 0.0
        %331 = vmatprep.subr.mxu0 0.0
        %332 = vmatpush1.msra.mxu0 0.0
        %333 = vmatprep.subr.mxu0 0.0
        %334 = vmatpush1.msra.mxu0 0.0
        %335 = vmatprep.subr.mxu0 0.0
        %336 = vmatpush1.msra.mxu0 0.0
        %337 = vmatprep.subr.mxu0 0.0
        %338 = vmatpush1.msra.mxu0 0.0
        %339 = vmatprep.subr.mxu0 0.0
        %340 = vmatpush1.msra.mxu0 0.0
        %341 = vmatprep.subr.mxu0 0.0
        %342 = vmatpush1.msra.mxu0 0.0
        %343 = vmatprep.subr.mxu0 0.0
        %344 = vmatpush1.msra.mxu0 0.0
        %345 = vmatprep.subr.mxu0 0.0
        %346 = vmatpush1.msra.mxu0 0.0
        %347 = vmatprep.subr.mxu0 0.0
        %348 = vmatpush1.msra.mxu0 0.0
        %349 = vmatprep.subr.mxu0 0.0
        %350 = vmatpush1.msra.mxu0 0.0
        %351 = vmatprep.subr.mxu0 0.0
        %352 = vmatpush1.msra.mxu0 0.0
        %353 = vmatprep.subr.mxu0 0.0
        %354 = vmatpush1.msra.mxu0 0.0
        %355 = vmatprep.subr.mxu0 0.0
        %356 = vmatpush1.msra.mxu0 0.0
        %357 = vmatprep.subr.mxu0 0.0
        %358 = vmatpush1.msra.mxu0 0.0
        %359 = vmatprep.subr.mxu0 0.0
        %360 = vmatpush1.msra.mxu0 0.0
        %361 = vmatprep.subr.mxu0 0.0
        %362 = vmatpush1.msra.mxu0 0.0
        %363 = vmatprep.subr.mxu0 0.0
        %364 = vmatpush1.msra.mxu0 0.0
        %365 = vmatprep.subr.mxu0 0.0
        %366 = vmatpush1.msra.mxu0 0.0
        %367 = vmatprep.subr.mxu0 0.0
        %368 = vmatpush1.msra.mxu0 0.0
        %369 = vmatprep.subr.mxu0 0.0
        %370 = vmatpush1.msra.mxu0 0.0
        %371 = vmatprep.subr.mxu0 0.0
        %372 = vmatpush1.msra.mxu0 0.0
        %373 = vmatprep.subr.mxu0 0.0
        %374 = vmatpush1.msra.mxu0 0.0
        %375 = vmatprep.mubr.f32.mxu0 0.0
        %376 = vmatmul.mubr.f32.gmra.mrb[0].mxu0 %v309
        %v377 = vpop.f32.mrb[0].mxu0
        %v378 = vadd.f32 0.0, %v377
        %v379 = vpop.f32.mrb[0].mxu0
        %380 = vdwg.mxu0
        %v381 = vadd.f32 %v301, %v378
        %382 = vst.msk [vmem:[#allocation2] sm:$0xff] %vm307, %v381
        // Predicated region
        $region45: #{tpu_custom_call.1} parent=31 // pred_check
          %p383 = pneg %p295
        $region46: #{tpu_custom_call.1} parent=31 // pred_check_branch
          %385 = sbr.rel (%p383) target = $region48
        $region47: #{tpu_custom_call.1} parent=31 // pred_region
          %v386 = vld [vmem:[#allocation2] sm:$0xff]
          %v387 = vld [vmem:[%s294] sm:$0x1]
          %v389 = vlaneseq
          %v390 = vshrl.u32 %v389, 7
          %v391 = vsub.s32 0, %v390
          %v392 = vrot.slane %v387, %v391
          %v394 = vadd.f32 %v386, %v392
          %v395 = vxor.u32 %v394, 2147483648
          %v396 = vmul.f32 %v395, 1.442695
          %v397 = vpow.pop %v396
          %v398 = vadd.f32 %v397, 1.0
          %v399 = vrcp.pop %v398
          %v400 = vmul.f32 1.0, %v399
          %v401 = vmul.f32 %v394, %v400
          %402 = vst.msk [vmem:[%s287] sm:$0xff] %vm307, %v401
        $region48: #{tpu_custom_call.1} parent=31 // pred_fallthru
          _
        %s403 = sand.u32 %s149, 1
        %s404 = scalar_lea.sflag [#allocation5], %s403
        %s405 = sand.u32 %s149, 1
        %s406 = smul.addr %s405, 8
        %s407 = scalar_lea.vmem [#allocation8], %s406
        // Predicated region
        $region49: #{tpu_custom_call.1} parent=31 // pred_check
          %p408 = pneg %p159
        $region50: #{tpu_custom_call.1} parent=31 // pred_check_branch
          %410 = sbr.rel (%p408) target = $region52
        $region51: #{tpu_custom_call.1} parent=31 // pred_region
          %s412 = ssub.s32 128, 128
          %413 = vsyncadd %s404, %s412
          %s414 = sadd.s32 %s31, %s30
          %s415 = sadd.s32 %s414, %s29
          %s416 = smul.addr %s415, 128
          %s417 = scalar_lea.hbm %s3, %s416
          %s419 = sshll.u32 %s407, 4
          %s420 = int_to_ptr.vmem [resolvable:$true] %s419
          %422 = dma.vmem_to_hbm [thread:$0]  %s420, 128, %s417, %s404
        $region52: #{tpu_custom_call.1} parent=31 // pred_fallthru
          _
      $region32: #{tpu_custom_call.1} parent=5 // pred_fallthru
        _
      %p423 = scmp.le.s32.totalorder 2, %s18
      // Predicated region
      $region53: #{tpu_custom_call.1} parent=5 // pred_check
        %p424 = pneg %p423
      $region54: #{tpu_custom_call.1} parent=5 // pred_check_branch
        %426 = sbr.rel (%p424) target = $region56
      $region55: #{tpu_custom_call.1} parent=5 // pred_region
        %s427 = ssub.s32 %s18, 2
        // Predicated region
        $region57: #{tpu_custom_call.1} parent=55 // pred_check
          %p428 = pneg %p165
        $region58: #{tpu_custom_call.1} parent=55 // pred_check_branch
          %430 = sbr.rel (%p428) target = $region60
        $region59: #{tpu_custom_call.1} parent=55 // pred_region
          %s431 = sand.u32 %s150, 1
          %s432 = scalar_lea.sflag [#allocation5], %s431
          %s433 = sand.u32 %s150, 1
          %s434 = smul.addr %s433, 8
          %s435 = scalar_lea.vmem [#allocation8], %s434
          %436 = dma.done %s432, 128
        $region60: #{tpu_custom_call.1} parent=55 // pred_fallthru
          _
      $region56: #{tpu_custom_call.1} parent=5 // pred_fallthru
        _
    $region6: #{tpu_custom_call.1} parent=1 // loop_footer
      %s22 = sadd.s32 1, %s18
    $region7: #{tpu_custom_call.1} parent=1 // loop_footer_branch
      %17 = sbr.rel target = $region3
    $region8: #{tpu_custom_call.1} parent=1 // loop_exit
      _
    %437 = vsyncpa [#allocation4], 1
    %s438 = scalar_lea.sflag [#allocation4], 1
    %439 = vsyncpa %s438, 1
    %440 = vsyncpa [#allocation7], 1
    %s441 = scalar_lea.sflag [#allocation7], 1
    %442 = vsyncpa %s441, 1
    %443 = vsyncpa [#allocation5], 1
    %s444 = scalar_lea.sflag [#allocation5], 1
    %445 = vsyncpa %s444, 1

</llo_original>
